<compile_context>
chip_gen: v7x
topology: tpu7x:2x2x1
jax: 0.10.0
libtpu: 0.0.40
codegen_flags: <defaults>
</compile_context>

<pallas_src>
import functools

import numpy as np
import jax
import jax.numpy as jnp
from jax.experimental import pallas as pl
from jax.experimental.pallas import tpu as pltpu


def _round_up(x, m):
    return (x + m - 1) // m * m


def doc_encoder_kernel(tok_ref, table_ref, wt_ref, out_ref, *,
                       seq_len, docs_per_step):
    """One grid step processes `docs_per_step` documents.

    tok_ref:   [TB * Lp, 1] int32   shifted token ids (flattened, Lp = padded L)
    table_ref: [Vp, D]      f32     embedding table (vocab padded to Vp rows)
    wt_ref:    [D, D]       f32     W_b transposed (so v = h @ W^T == W @ h)
    out_ref:   [TB, D]      f32     per-document context vectors
    """
    tb = docs_per_step
    d = out_ref.shape[1]
    lp = tok_ref.shape[0] // tb
    vp = table_ref.shape[0]

    ids = tok_ref[...]                                        # [TB*Lp, 1] int32
    table = table_ref[...]                                    # [Vp, D]   f32

    # ---- in-kernel embedding gather via one-hot matmul (MXU) ----------------
    # TODO(synk): for large vocabularies this one-hot gather does not scale;
    # switch to a scalar-prefetch / DMA row gather (or keep jnp.take outside).
    lane = jax.lax.broadcasted_iota(jnp.int32, (tb * lp, vp), 1)
    onehot = (ids == lane).astype(jnp.float32)                # [TB*Lp, Vp]
    emb_flat = jnp.dot(onehot, table,
                       preferred_element_type=jnp.float32)    # [TB*Lp, D]
    # Lane-preserving, tile-aligned split (lp is a multiple of 8).
    emb = jnp.reshape(emb_flat, (tb, lp, d))                  # [TB, Lp, D]

    # ---- mask out the extra Lp - L padding slots (real pads stay included) --
    pos = jax.lax.broadcasted_iota(jnp.int32, (tb, lp), 1)
    token_mask = pos < seq_len                                # [TB, Lp] bool
    valid = token_mask.astype(jnp.float32)                    # [TB, Lp]

    # hidden_0: mean over the max_len token slots of each document
    h = jnp.sum(emb * valid[:, :, None], axis=1) * (1.0 / seq_len)   # [TB, D]

    # ---- reassociated attention logits:  (emb @ W) @ h == emb @ (W @ h) -----
    v = jnp.dot(h, wt_ref[...],
                preferred_element_type=jnp.float32)           # [TB, D] = W @ h
    scores = jnp.sum(emb * v[:, None, :], axis=2)             # [TB, Lp] (VPU)

    # softmax over the token axis (padding slots excluded), numerically stable
    m = jnp.max(jnp.where(token_mask, scores, -jnp.inf), axis=1, keepdims=True)
    p = jnp.exp(scores - m) * valid
    a = p / jnp.sum(p, axis=1, keepdims=True)                 # [TB, Lp]

    # context vector per document (VPU multiply + sublane reduce)
    out_ref[...] = jnp.sum(a[:, :, None] * emb, axis=1)       # [TB, D]


def document_encoder_forward(tokens_shifted, emb_table, w_b, *, tb=128):
    """tokens_shifted: int32 [B, L] (already has +2 applied, pad -2 -> 0).

    emb_table: [vocab + 2, D] float32, w_b: [D, D] float32.
    Returns [B, D] float32.
    """
    tokens_shifted = jnp.asarray(tokens_shifted, jnp.int32)
    B, L = tokens_shifted.shape
    V, D = emb_table.shape

    TB = min(int(tb), _round_up(B, 8))     # documents per grid step
    Bp = _round_up(B, TB)                  # batch padded to a multiple of TB
    Lp = _round_up(L, 8)                   # seq padded to sublane multiple
    Vp = _round_up(V, 128)                 # vocab padded to lane multiple

    tok = jnp.zeros((Bp, Lp), jnp.int32).at[:B, :L].set(tokens_shifted)
    tok_flat = tok.reshape(Bp * Lp, 1)

    table = jnp.zeros((Vp, D), jnp.float32).at[:V].set(
        jnp.asarray(emb_table, jnp.float32))
    w_t = jnp.asarray(w_b, jnp.float32).T  # kernel computes v = h @ W^T

    kernel = functools.partial(doc_encoder_kernel,
                               seq_len=L, docs_per_step=TB)

    out = pl.pallas_call(
        kernel,
        out_shape=jax.ShapeDtypeStruct((Bp, D), jnp.float32),
        grid=(Bp // TB,),
        in_specs=[
            # TB documents' worth of token ids per grid step.
            pl.BlockSpec((TB * Lp, 1), lambda b: (b, 0)),
            # Full embedding table, VMEM-resident, constant across the grid.
            pl.BlockSpec((Vp, D), lambda b: (0, 0)),
            # Full W_b^T, VMEM-resident, constant across the grid.
            pl.BlockSpec((D, D), lambda b: (0, 0)),
        ],
        out_specs=pl.BlockSpec((TB, D), lambda b: (b, 0)),
        compiler_params=pltpu.CompilerParams(
            dimension_semantics=("parallel",)),
    )(tok_flat, table, w_t)
    return out[:B]


def _pad_and_shift(docstrings, max_len):
    """Reproduces the Python-side padding / truncation in forward()."""
    seq = []
    for d in docstrings:
        d = list(d)
        if len(d) > max_len:
            seq.append(d[:max_len])
        else:
            seq.append(d + [-2] * (max_len - len(d)))
    enc = np.asarray(seq, dtype=np.int32)
    return enc + 2   # pad value -2 maps to row 0 of the embedding table


def _reference(tokens_shifted, emb_table, w_b):
    emb = jnp.take(emb_table, tokens_shifted, axis=0).astype(jnp.float32)  # [B,L,D]
    h = jnp.mean(emb, axis=1)                                              # [B,D]
    ha = jnp.einsum('bld,de->ble', emb, w_b)                               # [B,L,D]
    scores = jnp.einsum('bld,bd->bl', ha, h)                               # [B,L]
    a = jax.nn.softmax(scores, axis=1)                                     # [B,L]
    return jnp.einsum('bl,bld->bd', a, emb)                                # [B,D]


if __name__ == "__main__":
    vocab_size = 50
    embedding_dim = 32
    max_len = 8
    key = jax.random.PRNGKey(0)
    k_emb, k_w = jax.random.split(key)

    # Deterministic synthetic parameters (shapes implied by __init__).
    # Embedding table needs vocab_size + 2 rows because of the +2 shift.
    emb_table = jax.random.normal(k_emb, (vocab_size + 2, embedding_dim),
                                  dtype=jnp.float32)
    # Xavier-uniform init for W_b [D, D].
    bound = float(np.sqrt(6.0 / (embedding_dim + embedding_dim)))
    w_b = jax.random.uniform(k_w, (embedding_dim, embedding_dim),
                             minval=-bound, maxval=bound, dtype=jnp.float32)

    # 12 variable-length "docstrings": mix of longer-than-max_len (truncated)
    # and shorter (padded with -2).  tb=8 -> two grid steps (exercises batching
    # and batch padding; production would use tb=128..512).
    rng = np.random.RandomState(0)
    lengths = [12, 5, 8, 3, 11, 7, 9, 4, 10, 6, 8, 2]
    docstrings = [rng.randint(0, vocab_size, size=n).tolist() for n in lengths]
    tokens_shifted = jnp.asarray(_pad_and_shift(docstrings, max_len))  # [12, 8]

    out = document_encoder_forward(tokens_shifted, emb_table, w_b, tb=8)
    out = jax.block_until_ready(out)

    ref = jax.block_until_ready(_reference(tokens_shifted, emb_table, w_b))
    np.testing.assert_allclose(np.asarray(out), np.asarray(ref),
                               rtol=1e-4, atol=1e-5)

    print("KERNEL_OK")
</pallas_src>

<mosaic_0001>
module attributes {stable_mosaic.version = 11 : i64} {
  func.func @doc_encoder_kernel(%arg0: i32, %arg1: memref<64x1xi32, #tpu.memory_space<vmem>>, %arg2: memref<128x32xf32, #tpu.memory_space<vmem>>, %arg3: memref<32x32xf32, #tpu.memory_space<vmem>>, %arg4: memref<8x32xf32, #tpu.memory_space<vmem>>) attributes {dimension_semantics = [#tpu.dimension_semantics<parallel>], iteration_bounds = array<i64: 2>, scalar_prefetch = 0 : i64, scratch_operands = 0 : i64, tpu.core_type = #tpu.core_type<tc>, window_params = [{transform_indices = @transform_0, window_bounds = array<i64: 64, 1>}, {pipeline_mode = #tpu.pipeline_mode<synchronous>, transform_indices = @transform_1, window_bounds = array<i64: 128, 32>}, {pipeline_mode = #tpu.pipeline_mode<synchronous>, transform_indices = @transform_2, window_bounds = array<i64: 32, 32>}, {transform_indices = @transform_3, window_bounds = array<i64: 8, 32>}]} {
    %c0 = arith.constant 0 : index
    %c0_0 = arith.constant 0 : index
    %0 = vector.load %arg1[%c0, %c0_0] : memref<64x1xi32, #tpu.memory_space<vmem>>, vector<64x1xi32>
    %c0_1 = arith.constant 0 : index
    %c0_2 = arith.constant 0 : index
    %1 = vector.load %arg2[%c0_1, %c0_2] : memref<128x32xf32, #tpu.memory_space<vmem>>, vector<128x32xf32>
    %2 = tpu.iota {dimensions = array<i32: 1>} : vector<64x128xi32>
    %3 = vector.broadcast %0 : vector<64x1xi32> to vector<64x128xi32>
    %4 = arith.cmpi eq, %3, %2 : vector<64x128xi32>
    %5 = arith.extui %4 : vector<64x128xi1> to vector<64x128xi32>
    %6 = arith.sitofp %5 : vector<64x128xi32> to vector<64x128xf32>
    %cst = arith.constant dense<0.000000e+00> : vector<64x32xf32>
    %7 = tpu.matmul %6, %1, %cst {dimension_numbers = #tpu.dot_dimension_numbers<[1], [0], [0], [1], [0, 0, 1, 1], [], []>} : vector<64x128xf32>, vector<128x32xf32>, vector<64x32xf32> -> vector<64x32xf32>
    %8 = vector.shape_cast %7 : vector<64x32xf32> to vector<8x8x32xf32>
    %9 = tpu.iota {dimensions = array<i32: 1>} : vector<8x8xi32>
    %c8_i32 = arith.constant 8 : i32
    %10 = vector.broadcast %c8_i32 : i32 to vector<8x8xi32>
    %11 = arith.cmpi slt, %9, %10 : vector<8x8xi32>
    %12 = arith.extui %11 : vector<8x8xi1> to vector<8x8xi32>
    %13 = arith.sitofp %12 : vector<8x8xi32> to vector<8x8xf32>
    %14 = vector.shape_cast %13 : vector<8x8xf32> to vector<8x8x1xf32>
    %15 = vector.broadcast %14 : vector<8x8x1xf32> to vector<8x8x32xf32>
    %16 = arith.mulf %8, %15 : vector<8x8x32xf32>
    %cst_3 = arith.constant dense<0.000000e+00> : vector<8x32xf32>
    %17 = vector.multi_reduction <add>, %16, %cst_3 [1] : vector<8x8x32xf32> to vector<8x32xf32>
    %cst_4 = arith.constant 1.250000e-01 : f32
    %18 = vector.broadcast %cst_4 : f32 to vector<8x32xf32>
    %19 = arith.mulf %17, %18 : vector<8x32xf32>
    %c0_5 = arith.constant 0 : index
    %c0_6 = arith.constant 0 : index
    %20 = vector.load %arg3[%c0_5, %c0_6] : memref<32x32xf32, #tpu.memory_space<vmem>>, vector<32x32xf32>
    %cst_7 = arith.constant dense<0.000000e+00> : vector<8x32xf32>
    %21 = tpu.matmul %19, %20, %cst_7 {dimension_numbers = #tpu.dot_dimension_numbers<[1], [0], [0], [1], [0, 0, 1, 1], [], []>} : vector<8x32xf32>, vector<32x32xf32>, vector<8x32xf32> -> vector<8x32xf32>
    %22 = vector.shape_cast %21 : vector<8x32xf32> to vector<8x1x32xf32>
    %23 = vector.broadcast %22 : vector<8x1x32xf32> to vector<8x8x32xf32>
    %24 = arith.mulf %8, %23 : vector<8x8x32xf32>
    %cst_8 = arith.constant dense<0.000000e+00> : vector<8x8xf32>
    %25 = vector.multi_reduction <add>, %24, %cst_8 [2] : vector<8x8x32xf32> to vector<8x8xf32>
    %cst_9 = arith.constant 0xFF800000 : f32
    %26 = vector.broadcast %cst_9 : f32 to vector<8x8xf32>
    %27 = arith.select %11, %25, %26 : vector<8x8xi1>, vector<8x8xf32>
    %cst_10 = arith.constant dense<0xFF800000> : vector<8xf32>
    %28 = vector.multi_reduction <maximumf>, %27, %cst_10 [1] : vector<8x8xf32> to vector<8xf32>
    %29 = vector.shape_cast %28 : vector<8xf32> to vector<8x1xf32>
    %30 = vector.broadcast %29 : vector<8x1xf32> to vector<8x8xf32>
    %31 = arith.subf %25, %30 : vector<8x8xf32>
    %32 = math.exp %31 : vector<8x8xf32>
    %33 = arith.mulf %32, %13 : vector<8x8xf32>
    %cst_11 = arith.constant dense<0.000000e+00> : vector<8xf32>
    %34 = vector.multi_reduction <add>, %33, %cst_11 [1] : vector<8x8xf32> to vector<8xf32>
    %35 = vector.shape_cast %34 : vector<8xf32> to vector<8x1xf32>
    %36 = vector.broadcast %35 : vector<8x1xf32> to vector<8x8xf32>
    %37 = arith.divf %33, %36 : vector<8x8xf32>
    %38 = vector.shape_cast %37 : vector<8x8xf32> to vector<8x8x1xf32>
    %39 = vector.broadcast %38 : vector<8x8x1xf32> to vector<8x8x32xf32>
    %40 = arith.mulf %39, %8 : vector<8x8x32xf32>
    %cst_12 = arith.constant dense<0.000000e+00> : vector<8x32xf32>
    %41 = vector.multi_reduction <add>, %40, %cst_12 [1] : vector<8x8x32xf32> to vector<8x32xf32>
    %c0_13 = arith.constant 0 : index
    %c0_14 = arith.constant 0 : index
    %42 = vector.load %arg4[%c0_13, %c0_14] : memref<8x32xf32, #tpu.memory_space<vmem>>, vector<8x32xf32>
    tpu.vector_store %arg4[%c0_13, %c0_14], %41 {strides = array<i32>} : memref<8x32xf32, #tpu.memory_space<vmem>>, vector<8x32xf32>,
    return
  }
  func.func @transform_0(%arg0: i32) -> (i32, i32) {
    %c0_i32 = arith.constant 0 : i32
    %c0_i32_0 = arith.constant 0 : i32
    return %arg0, %c0_i32 : i32, i32
  }
  func.func @transform_1(%arg0: i32) -> (i32, i32) {
    %c0_i32 = arith.constant 0 : i32
    %c0_i32_0 = arith.constant 0 : i32
    %c0_i32_1 = arith.constant 0 : i32
    return %c0_i32, %c0_i32_0 : i32, i32
  }
  func.func @transform_2(%arg0: i32) -> (i32, i32) {
    %c0_i32 = arith.constant 0 : i32
    %c0_i32_0 = arith.constant 0 : i32
    %c0_i32_1 = arith.constant 0 : i32
    return %c0_i32, %c0_i32_0 : i32, i32
  }
  func.func @transform_3(%arg0: i32) -> (i32, i32) {
    %c0_i32 = arith.constant 0 : i32
    %c0_i32_0 = arith.constant 0 : i32
    return %arg0, %c0_i32 : i32, i32
  }
}

</mosaic_0001>

<llo_original>
// kernel: tpu_custom_call.1
$region0: #{tpu_custom_call.1}
  #allocation0 [shape = 'u32[]', space=smem, size = 0x4, offset = 0x4, fixed_abs, tag = 'smem constant byte address 0x4 - core index']
  #allocation1 [shape = 'u32[144,128]{1,0:T(1,128)}', space=vmem, size = 0x12000, scoped, tag = 'internal scratch']
  %s0 = inlined_call_operand.vmem [shape: s32[128,1], index: 0, kind: input, shape index: {}]
  %s1 = inlined_call_operand.vmem [shape: f32[128,32], index: 1, kind: input, shape index: {}]
  %s2 = inlined_call_operand.vmem [shape: f32[32,32], index: 2, kind: input, shape index: {}]
  %s3 = inlined_call_operand.hbm [shape: f32[16,32], index: 3, kind: output, shape index: {}]
  %s4 = sld [smem:[#allocation0]]
  $region45: #{tpu_custom_call.1} parent=0
    _
  %s6 = ssub.s32 1, %s4
  %s7 = scalar_select 0, %s6, %s4
  $region1: #{tpu_custom_call.1} parent=0
    #allocation2 [shape = 'u8[8192]{0}', space=vmem, size = 0x2000, scoped, tag = 'output window, operand 0']
    #allocation3 [shape = 's32[2]{0}', space=sflag, size = 0x8, scoped, tag = 'scoped memory for tpu_custom_call.1']
    %8 = vsyncpa [#allocation3], 0
    %s9 = scalar_lea.sflag [#allocation3], 1
    %10 = vsyncpa %s9, 0
    loop: start=0, step=1, limit=4
    $region2: #{tpu_custom_call.1} parent=1 // loop_pre_header
      _
    $region3: #{tpu_custom_call.1} parent=1 // loop_header
      %s12 = sphi 0, %s16
      %p13 = scmp.ge.s32.totalorder %s12, 4
      %s22 = sphi 0, %s24
      %s25 = sphi 0, %s22
      %s26 = sphi 0, %s25
      %s42 = sphi 0, %s26
      %s46 = sphi 0, %s46
      %s48 = sphi 0, %s46
      %s49 = sphi 0, %s48
      %s63 = sphi 0, %s49
      %s67 = sphi 0, %s67
      %s69 = sphi 0, %s67
      %s70 = sphi 0, %s69
      %s84 = sphi 0, %s70
      %s90 = sphi 0, %s92
      %s93 = sphi 0, %s90
      %s94 = sphi 0, %s93
      %s110 = sphi 0, %s94
    $region4: #{tpu_custom_call.1} parent=1 // loop_header_branch
      %15 = sbr.rel (%p13) target = $region8
    $region5: #{tpu_custom_call.1} parent=1 // loop_body
      %s17 = ssub.s32 %s12, 1
      %s18 = ssub.s32 %s12, 2
      %s19 = sadd.s32 %s12, 1
      %s20 = ssub.s32 %s12, %s19
      %p21 = scmp.eq.s32.totalorder %s20, 0
      %s23 = sadd.s32 %s22, 1
      %s24 = scalar_select %p21, %s22, %s23
      %p27 = pneg %p21
      %p28 = scmp.eq.s32.totalorder %s12, 1
      %p29 = por %p27, %p28
      %p30 = scmp.ne.s32.totalorder %s22, %s25
      %p31 = scmp.eq.s32.totalorder %s12, 0
      %p32 = por %p30, %p31
      %p33 = scmp.ne.s32.totalorder %s22, %s25
      %p34 = scmp.eq.s32.totalorder %s17, 1
      %p35 = por %p33, %p34
      %p36 = scmp.ne.s32.totalorder %s25, %s26
      %p37 = scmp.eq.s32.totalorder %s17, 0
      %p38 = por %p36, %p37
      %p39 = scmp.ne.s32.totalorder %s25, %s26
      %p40 = scmp.eq.s32.totalorder %s18, 1
      %p41 = por %p39, %p40
      %p43 = scmp.ne.s32.totalorder %s26, %s42
      %p44 = scmp.eq.s32.totalorder %s18, 0
      %p45 = por %p43, %p44
      %s47 = sadd.s32 %s46, 1
      %p50 = scmp.eq.s32.totalorder %s12, 1
      %p51 = scmp.ne.s32.totalorder %s46, %s48
      %p52 = scmp.eq.s32.totalorder %s12, 0
      %p53 = por %p51, %p52
      %p54 = scmp.ne.s32.totalorder %s46, %s48
      %p55 = scmp.eq.s32.totalorder %s17, 1
      %p56 = por %p54, %p55
      %p57 = scmp.ne.s32.totalorder %s48, %s49
      %p58 = scmp.eq.s32.totalorder %s17, 0
      %p59 = por %p57, %p58
      %p60 = scmp.ne.s32.totalorder %s48, %s49
      %p61 = scmp.eq.s32.totalorder %s18, 1
      %p62 = por %p60, %p61
      %p64 = scmp.ne.s32.totalorder %s49, %s63
      %p65 = scmp.eq.s32.totalorder %s18, 0
      %p66 = por %p64, %p65
      %s68 = sadd.s32 %s67, 1
      %p71 = scmp.eq.s32.totalorder %s12, 1
      %p72 = scmp.ne.s32.totalorder %s67, %s69
      %p73 = scmp.eq.s32.totalorder %s12, 0
      %p74 = por %p72, %p73
      %p75 = scmp.ne.s32.totalorder %s67, %s69
      %p76 = scmp.eq.s32.totalorder %s17, 1
      %p77 = por %p75, %p76
      %p78 = scmp.ne.s32.totalorder %s69, %s70
      %p79 = scmp.eq.s32.totalorder %s17, 0
      %p80 = por %p78, %p79
      %p81 = scmp.ne.s32.totalorder %s69, %s70
      %p82 = scmp.eq.s32.totalorder %s18, 1
      %p83 = por %p81, %p82
      %p85 = scmp.ne.s32.totalorder %s70, %s84
      %p86 = scmp.eq.s32.totalorder %s18, 0
      %p87 = por %p85, %p86
      %s88 = ssub.s32 %s12, %s19
      %p89 = scmp.eq.s32.totalorder %s88, 0
      %s91 = sadd.s32 %s90, 1
      %s92 = scalar_select %p89, %s90, %s91
      %p95 = pneg %p89
      %p96 = scmp.eq.s32.totalorder %s12, 1
      %p97 = por %p95, %p96
      %p98 = scmp.ne.s32.totalorder %s90, %s93
      %p99 = scmp.eq.s32.totalorder %s12, 0
      %p100 = por %p98, %p99
      %p101 = scmp.ne.s32.totalorder %s90, %s93
      %p102 = scmp.eq.s32.totalorder %s17, 1
      %p103 = por %p101, %p102
      %p104 = scmp.ne.s32.totalorder %s93, %s94
      %p105 = scmp.eq.s32.totalorder %s17, 0
      %p106 = por %p104, %p105
      %p107 = scmp.ne.s32.totalorder %s93, %s94
      %p108 = scmp.eq.s32.totalorder %s18, 1
      %p109 = por %p107, %p108
      %p111 = scmp.ne.s32.totalorder %s94, %s110
      %p112 = scmp.eq.s32.totalorder %s18, 0
      %p113 = por %p111, %p112
      %p114 = scmp.le.s32.totalorder 1, %s12
      %p115 = scmp.lt.s32.totalorder %s12, 3
      %p116 = pnand %p114, %p115
      %p117 = pneg %p116
      // Predicated region
      $region9: #{tpu_custom_call.1} parent=5 // pred_check
        _
      $region10: #{tpu_custom_call.1} parent=5 // pred_check_branch
        %119 = sbr.rel (%p116) target = $region12
      $region11: #{tpu_custom_call.1} parent=5 // pred_region
        %s120 = ssub.s32 %s12, 1
        // Predicated region
        $region13: #{tpu_custom_call.1} parent=11 // pred_check
          %p121 = pneg %p59
        $region14: #{tpu_custom_call.1} parent=11 // pred_check_branch
          %123 = sbr.rel (%p121) target = $region16
        $region15: #{tpu_custom_call.1} parent=11 // pred_region
          _
        $region16: #{tpu_custom_call.1} parent=11 // pred_fallthru
          _
        // Predicated region
        $region17: #{tpu_custom_call.1} parent=11 // pred_check
          %p124 = pneg %p80
        $region18: #{tpu_custom_call.1} parent=11 // pred_check_branch
          %126 = sbr.rel (%p124) target = $region20
        $region19: #{tpu_custom_call.1} parent=11 // pred_region
          _
        $region20: #{tpu_custom_call.1} parent=11 // pred_fallthru
          _
      $region12: #{tpu_custom_call.1} parent=5 // pred_fallthru
        _
      %p127 = scmp.lt.s32.totalorder %s12, 2
      // Predicated region
      $region21: #{tpu_custom_call.1} parent=5 // pred_check
        %p128 = pneg %p127
      $region22: #{tpu_custom_call.1} parent=5 // pred_check_branch
        %130 = sbr.rel (%p128) target = $region24
      $region23: #{tpu_custom_call.1} parent=5 // pred_region
        // Predicated region
        $region25: #{tpu_custom_call.1} parent=23 // pred_check
          %p131 = pneg %p32
        $region26: #{tpu_custom_call.1} parent=23 // pred_check_branch
          %133 = sbr.rel (%p131) target = $region28
        $region27: #{tpu_custom_call.1} parent=23 // pred_region
          %s134 = smul.u32 8, %s12
          %p135 = scmp.lt.s32.totalorder %s134, 15
          %s136 = scalar_select %p135, %s134, 15
          %s137 = smul.addr %s136, 8
          %s138 = scalar_lea.vmem %s0, %s137
          %s139 = smul.u32 8, %s12
        $region28: #{tpu_custom_call.1} parent=23 // pred_fallthru
          _
      $region24: #{tpu_custom_call.1} parent=5 // pred_fallthru
        _
      %p140 = scmp.le.s32.totalorder 1, %s12
      %p141 = scmp.lt.s32.totalorder %s12, 3
      %p142 = pnand %p140, %p141
      %p143 = pneg %p142
      // Predicated region
      $region29: #{tpu_custom_call.1} parent=5 // pred_check
        _
      $region30: #{tpu_custom_call.1} parent=5 // pred_check_branch
        %145 = sbr.rel (%p142) target = $region32
      $region31: #{tpu_custom_call.1} parent=5 // pred_region
        %s146 = ssub.s32 %s12, 1
        %s147 = smul.u32 8, %s17
        %p148 = scmp.lt.s32.totalorder %s147, 15
        %s149 = scalar_select %p148, %s147, 15
        %s150 = smul.addr %s149, 8
        %s151 = scalar_lea.vmem %s0, %s150
        %p152 = pneg %p38
        %p153 = pneg %p35
        %p154 = pneg %p59
        %p155 = pneg %p56
        %p156 = pneg %p80
        %p157 = pneg %p77
        %p158 = pneg %p106
        %p159 = pneg %p103
        %s160 = sand.u32 %s93, 1
        %s161 = scalar_lea.sflag [#allocation3], %s160
        %s162 = sand.u32 %s93, 1
        %s163 = smul.addr %s162, 8
        %s164 = scalar_lea.vmem [#allocation2], %s163
        %s165 = smul.u32 8, %s17
        %p166 = scmp.lt.s32.totalorder %s165, 15
        %s167 = scalar_select %p166, %s165, 15
        %s168 = smul.addr %s167, 8
        %s169 = scalar_lea.vmem %s0, %s168
        %s170 = smul.u32 8, %s17
        %v171 = vld [vmem:[%s169] sm:$0xff]
        %v172 = vld [vmem:[%s169 + $0x8] sm:$0xff]
        %v173 = vld [vmem:[%s169 + $0x10] sm:$0xff]
        %v174 = vld [vmem:[%s169 + $0x18] sm:$0xff]
        %v175 = vld [vmem:[%s169 + $0x20] sm:$0xff]
        %v176 = vld [vmem:[%s169 + $0x28] sm:$0xff]
        %v177 = vld [vmem:[%s169 + $0x30] sm:$0xff]
        %v178 = vld [vmem:[%s169 + $0x38] sm:$0xff]
        %v179 = vld [vmem:[%s1] sm:$0xff]
        %v180 = vld [vmem:[%s1 + $0x8] sm:$0xff]
        %v181 = vld [vmem:[%s1 + $0x10] sm:$0xff]
        %v182 = vld [vmem:[%s1 + $0x18] sm:$0xff]
        %v183 = vld [vmem:[%s1 + $0x20] sm:$0xff]
        %v184 = vld [vmem:[%s1 + $0x28] sm:$0xff]
        %v185 = vld [vmem:[%s1 + $0x30] sm:$0xff]
        %v186 = vld [vmem:[%s1 + $0x38] sm:$0xff]
        %v187 = vld [vmem:[%s1 + $0x40] sm:$0xff]
        %v188 = vld [vmem:[%s1 + $0x48] sm:$0xff]
        %v189 = vld [vmem:[%s1 + $0x50] sm:$0xff]
        %v190 = vld [vmem:[%s1 + $0x58] sm:$0xff]
        %v191 = vld [vmem:[%s1 + $0x60] sm:$0xff]
        %v192 = vld [vmem:[%s1 + $0x68] sm:$0xff]
        %v193 = vld [vmem:[%s1 + $0x70] sm:$0xff]
        %v194 = vld [vmem:[%s1 + $0x78] sm:$0xff]
        %v195 = vlaneseq
        %v196 = vand.u32 %v195, 127
        %197 = vset.pattern.permute.xlu0 0
        %198 = vperm.xlu0 %197, %v171
        %v199 = vpop.permute.xlu0 %198
        %200 = vset.pattern.permute.xlu0 0
        %201 = vperm.xlu0 %200, %v172
        %v202 = vpop.permute.xlu0 %201
        %203 = vset.pattern.permute.xlu0 0
        %204 = vperm.xlu0 %203, %v173
        %v205 = vpop.permute.xlu0 %204
        %206 = vset.pattern.permute.xlu0 0
        %207 = vperm.xlu0 %206, %v174
        %v208 = vpop.permute.xlu0 %207
        %209 = vset.pattern.permute.xlu0 0
        %210 = vperm.xlu0 %209, %v175
        %v211 = vpop.permute.xlu0 %210
        %212 = vset.pattern.permute.xlu0 0
        %213 = vperm.xlu0 %212, %v176
        %v214 = vpop.permute.xlu0 %213
        %215 = vset.pattern.permute.xlu0 0
        %216 = vperm.xlu0 %215, %v177
        %v217 = vpop.permute.xlu0 %216
        %218 = vset.pattern.permute.xlu0 0
        %219 = vperm.xlu0 %218, %v178
        %v220 = vpop.permute.xlu0 %219
        %vm221 = vcmp.eq.s32.totalorder %v199, %v196
        %vm222 = vcmp.eq.s32.totalorder %v202, %v196
        %vm223 = vcmp.eq.s32.totalorder %v205, %v196
        %vm224 = vcmp.eq.s32.totalorder %v208, %v196
        %vm225 = vcmp.eq.s32.totalorder %v211, %v196
        %vm226 = vcmp.eq.s32.totalorder %v214, %v196
        %vm227 = vcmp.eq.s32.totalorder %v217, %v196
        %vm228 = vcmp.eq.s32.totalorder %v220, %v196
        %v229 = vsel %vm221, 1, 0
        %v230 = vsel %vm222, 1, 0
        %v231 = vsel %vm223, 1, 0
        %v232 = vsel %vm224, 1, 0
        %v233 = vsel %vm225, 1, 0
        %v234 = vsel %vm226, 1, 0
        %v235 = vsel %vm227, 1, 0
        %v236 = vsel %vm228, 1, 0
        %v237 = vcvt.s32.f32 %v229
        %v238 = vcvt.s32.f32 %v230
        %v239 = vcvt.s32.f32 %v231
        %v240 = vcvt.s32.f32 %v232
        %v241 = vcvt.s32.f32 %v233
        %v242 = vcvt.s32.f32 %v234
        %v243 = vcvt.s32.f32 %v235
        %v244 = vcvt.s32.f32 %v236
        %245 = vmatprep.subr.mxu0 0.0
        %246 = vmatpush1.msra.mxu0 %v179
        %247 = vmatprep.subr.mxu0 0.0
        %248 = vmatpush1.msra.mxu0 %v180
        %249 = vmatprep.subr.mxu0 0.0
        %250 = vmatpush1.msra.mxu0 %v181
        %251 = vmatprep.subr.mxu0 0.0
        %252 = vmatpush1.msra.mxu0 %v182
        %253 = vmatprep.subr.mxu0 0.0
        %254 = vmatpush1.msra.mxu0 %v183
        %255 = vmatprep.subr.mxu0 0.0
        %256 = vmatpush1.msra.mxu0 %v184
        %257 = vmatprep.subr.mxu0 0.0
        %258 = vmatpush1.msra.mxu0 %v185
        %259 = vmatprep.subr.mxu0 0.0
        %260 = vmatpush1.msra.mxu0 %v186
        %261 = vmatprep.subr.mxu0 0.0
        %262 = vmatpush1.msra.mxu0 %v187
        %263 = vmatprep.subr.mxu0 0.0
        %264 = vmatpush1.msra.mxu0 %v188
        %265 = vmatprep.subr.mxu0 0.0
        %266 = vmatpush1.msra.mxu0 %v189
        %267 = vmatprep.subr.mxu0 0.0
        %268 = vmatpush1.msra.mxu0 %v190
        %269 = vmatprep.subr.mxu0 0.0
        %270 = vmatpush1.msra.mxu0 %v191
        %271 = vmatprep.subr.mxu0 0.0
        %272 = vmatpush1.msra.mxu0 %v192
        %273 = vmatprep.subr.mxu0 0.0
        %274 = vmatpush1.msra.mxu0 %v193
        %275 = vmatprep.subr.mxu0 0.0
        %276 = vmatpush1.msra.mxu0 %v194
        %277 = vmatprep.subr.mxu0 0.0
        %278 = vmatpush1.msra.mxu0 0.0
        %279 = vmatprep.subr.mxu0 0.0
        %280 = vmatpush1.msra.mxu0 0.0
        %281 = vmatprep.subr.mxu0 0.0
        %282 = vmatpush1.msra.mxu0 0.0
        %283 = vmatprep.subr.mxu0 0.0
        %284 = vmatpush1.msra.mxu0 0.0
        %285 = vmatprep.subr.mxu0 0.0
        %286 = vmatpush1.msra.mxu0 0.0
        %287 = vmatprep.subr.mxu0 0.0
        %288 = vmatpush1.msra.mxu0 0.0
        %289 = vmatprep.subr.mxu0 0.0
        %290 = vmatpush1.msra.mxu0 0.0
        %291 = vmatprep.subr.mxu0 0.0
        %292 = vmatpush1.msra.mxu0 0.0
        %293 = vmatprep.subr.mxu0 0.0
        %294 = vmatpush1.msra.mxu0 0.0
        %295 = vmatprep.subr.mxu0 0.0
        %296 = vmatpush1.msra.mxu0 0.0
        %297 = vmatprep.subr.mxu0 0.0
        %298 = vmatpush1.msra.mxu0 0.0
        %299 = vmatprep.subr.mxu0 0.0
        %300 = vmatpush1.msra.mxu0 0.0
        %301 = vmatprep.subr.mxu0 0.0
        %302 = vmatpush1.msra.mxu0 0.0
        %303 = vmatprep.subr.mxu0 0.0
        %304 = vmatpush1.msra.mxu0 0.0
        %305 = vmatprep.subr.mxu0 0.0
        %306 = vmatpush1.msra.mxu0 0.0
        %307 = vmatprep.subr.mxu0 0.0
        %308 = vmatpush1.msra.mxu0 0.0
        %309 = vmatprep.mubr.f32.mxu0 0.0
        %310 = vmatmul.mubr.f32.gmra.mrb[0].mxu0 %v237
        %v311 = vpop.f32.mrb[0].mxu0
        %v312 = vadd.f32 0.0, %v311
        %v313 = vpop.f32.mrb[0].mxu0
        %314 = vmatprep.mubr.f32.mxu0 0.0
        %315 = vmatmul.mubr.f32.gmra.mrb[0].mxu0 %v238
        %v316 = vpop.f32.mrb[0].mxu0
        %v317 = vadd.f32 0.0, %v316
        %v318 = vpop.f32.mrb[0].mxu0
        %319 = vmatprep.mubr.f32.mxu0 0.0
        %320 = vmatmul.mubr.f32.gmra.mrb[0].mxu0 %v239
        %v321 = vpop.f32.mrb[0].mxu0
        %v322 = vadd.f32 0.0, %v321
        %v323 = vpop.f32.mrb[0].mxu0
        %324 = vmatprep.mubr.f32.mxu0 0.0
        %325 = vmatmul.mubr.f32.gmra.mrb[0].mxu0 %v240
        %v326 = vpop.f32.mrb[0].mxu0
        %v327 = vadd.f32 0.0, %v326
        %v328 = vpop.f32.mrb[0].mxu0
        %329 = vmatprep.mubr.f32.mxu0 0.0
        %330 = vmatmul.mubr.f32.gmra.mrb[0].mxu0 %v241
        %v331 = vpop.f32.mrb[0].mxu0
        %v332 = vadd.f32 0.0, %v331
        %v333 = vpop.f32.mrb[0].mxu0
        %334 = vmatprep.mubr.f32.mxu0 0.0
        %335 = vmatmul.mubr.f32.gmra.mrb[0].mxu0 %v242
        %v336 = vpop.f32.mrb[0].mxu0
        %v337 = vadd.f32 0.0, %v336
        %v338 = vpop.f32.mrb[0].mxu0
        %339 = vmatprep.mubr.f32.mxu0 0.0
        %340 = vmatmul.mubr.f32.gmra.mrb[0].mxu0 %v243
        %v341 = vpop.f32.mrb[0].mxu0
        %v342 = vadd.f32 0.0, %v341
        %v343 = vpop.f32.mrb[0].mxu0
        %344 = vmatprep.mubr.f32.mxu0 0.0
        %345 = vmatmul.mubr.f32.gmra.mrb[0].mxu0 %v244
        %v346 = vpop.f32.mrb[0].mxu0
        %v347 = vadd.f32 0.0, %v346
        %v348 = vpop.f32.mrb[0].mxu0
        %349 = vdwg.mxu0
        %vm350 = vcmp.lt.s32.totalorder %v196, 8
        %v351 = vsel %vm350, 1, 0
        %v352 = vcvt.s32.f32 %v351
        %354 = vbcast.lane.b32.xlu0 %v352, 256
        %v355 = vpop.permute.xlu0 %354
        %v356 = vmul.f32 %v312, %v355
        %v357 = vmul.f32 %v317, %v355
        %v358 = vmul.f32 %v322, %v355
        %v359 = vmul.f32 %v327, %v355
        %v360 = vmul.f32 %v332, %v355
        %v361 = vmul.f32 %v337, %v355
        %v362 = vmul.f32 %v342, %v355
        %v363 = vmul.f32 %v347, %v355
        %vm364 = vcmask 261120
        %v365 = vsel %vm364, %v356, 0.0
        %v366 = vrot.slane %v365, 4
        %v367 = vadd.f32 %v365, %v366
        %v368 = vrot.slane %v367, 2
        %v369 = vadd.f32 %v367, %v368
        %v370 = vrot.slane %v369, 1
        %v371 = vadd.f32 %v369, %v370
        %v372 = vsel %vm364, %v357, 0.0
        %v373 = vrot.slane %v372, 4
        %v374 = vadd.f32 %v372, %v373
        %v375 = vrot.slane %v374, 2
        %v376 = vadd.f32 %v374, %v375
        %v377 = vrot.slane %v376, 1
        %v378 = vadd.f32 %v376, %v377
        %v379 = vsel %vm364, %v358, 0.0
        %v380 = vrot.slane %v379, 4
        %v381 = vadd.f32 %v379, %v380
        %v382 = vrot.slane %v381, 2
        %v383 = vadd.f32 %v381, %v382
        %v384 = vrot.slane %v383, 1
        %v385 = vadd.f32 %v383, %v384
        %v386 = vsel %vm364, %v359, 0.0
        %v387 = vrot.slane %v386, 4
        %v388 = vadd.f32 %v386, %v387
        %v389 = vrot.slane %v388, 2
        %v390 = vadd.f32 %v388, %v389
        %v391 = vrot.slane %v390, 1
        %v392 = vadd.f32 %v390, %v391
        %v393 = vsel %vm364, %v360, 0.0
        %v394 = vrot.slane %v393, 4
        %v395 = vadd.f32 %v393, %v394
        %v396 = vrot.slane %v395, 2
        %v397 = vadd.f32 %v395, %v396
        %v398 = vrot.slane %v397, 1
        %v399 = vadd.f32 %v397, %v398
        %v400 = vsel %vm364, %v361, 0.0
        %v401 = vrot.slane %v400, 4
        %v402 = vadd.f32 %v400, %v401
        %v403 = vrot.slane %v402, 2
        %v404 = vadd.f32 %v402, %v403
        %v405 = vrot.slane %v404, 1
        %v406 = vadd.f32 %v404, %v405
        %v407 = vsel %vm364, %v362, 0.0
        %v408 = vrot.slane %v407, 4
        %v409 = vadd.f32 %v407, %v408
        %v410 = vrot.slane %v409, 2
        %v411 = vadd.f32 %v409, %v410
        %v412 = vrot.slane %v411, 1
        %v413 = vadd.f32 %v411, %v412
        %v414 = vsel %vm364, %v363, 0.0
        %v415 = vrot.slane %v414, 4
        %v416 = vadd.f32 %v414, %v415
        %v417 = vrot.slane %v416, 2
        %v418 = vadd.f32 %v416, %v417
        %v419 = vrot.slane %v418, 1
        %v420 = vadd.f32 %v418, %v419
        %v421 = vmul.f32 %v371, 0.125
        %v422 = vmul.f32 %v378, 0.125
        %v423 = vmul.f32 %v385, 0.125
        %v424 = vmul.f32 %v392, 0.125
        %v425 = vmul.f32 %v399, 0.125
        %v426 = vmul.f32 %v406, 0.125
        %v427 = vmul.f32 %v413, 0.125
        %v428 = vmul.f32 %v420, 0.125
        %v429 = vld [vmem:[%s2] sm:$0xff]
        %v430 = vld [vmem:[%s2 + $0x8] sm:$0xff]
        %v431 = vld [vmem:[%s2 + $0x10] sm:$0xff]
        %v432 = vld [vmem:[%s2 + $0x18] sm:$0xff]
        %vm441 = vcmask 1041409
        %v442 = vsel %vm441, %v422, %v421
        %vm443 = vcmask 1042434
        %v444 = vsel %vm443, %v423, %v442
        %vm445 = vcmask 1043459
        %v446 = vsel %vm445, %v424, %v444
        %vm447 = vcmask 1044484
        %v448 = vsel %vm447, %v425, %v446
        %vm449 = vcmask 1045509
        %v450 = vsel %vm449, %v426, %v448
        %vm451 = vcmask 1046534
        %v452 = vsel %vm451, %v427, %v450
        %vm453 = vcmask 1047559
        %v454 = vsel %vm453, %v428, %v452
        %v455 = vsel %vm364, %v454, 0
        %457 = vmatprep.subr.mxu0 0.0
        %458 = vmatpush1.msra.mxu0 %v429
        %459 = vmatprep.subr.mxu0 0.0
        %460 = vmatpush1.msra.mxu0 %v430
        %461 = vmatprep.subr.mxu0 0.0
        %462 = vmatpush1.msra.mxu0 %v431
        %463 = vmatprep.subr.mxu0 0.0
        %464 = vmatpush1.msra.mxu0 %v432
        %465 = vmatprep.subr.mxu0 0.0
        %466 = vmatpush1.msra.mxu0 0.0
        %467 = vmatprep.subr.mxu0 0.0
        %468 = vmatpush1.msra.mxu0 0.0
        %469 = vmatprep.subr.mxu0 0.0
        %470 = vmatpush1.msra.mxu0 0.0
        %471 = vmatprep.subr.mxu0 0.0
        %472 = vmatpush1.msra.mxu0 0.0
        %473 = vmatprep.subr.mxu0 0.0
        %474 = vmatpush1.msra.mxu0 0.0
        %475 = vmatprep.subr.mxu0 0.0
        %476 = vmatpush1.msra.mxu0 0.0
        %477 = vmatprep.subr.mxu0 0.0
        %478 = vmatpush1.msra.mxu0 0.0
        %479 = vmatprep.subr.mxu0 0.0
        %480 = vmatpush1.msra.mxu0 0.0
        %481 = vmatprep.subr.mxu0 0.0
        %482 = vmatpush1.msra.mxu0 0.0
        %483 = vmatprep.subr.mxu0 0.0
        %484 = vmatpush1.msra.mxu0 0.0
        %485 = vmatprep.subr.mxu0 0.0
        %486 = vmatpush1.msra.mxu0 0.0
        %487 = vmatprep.subr.mxu0 0.0
        %488 = vmatpush1.msra.mxu0 0.0
        %489 = vmatprep.subr.mxu0 0.0
        %490 = vmatpush1.msra.mxu0 0.0
        %491 = vmatprep.subr.mxu0 0.0
        %492 = vmatpush1.msra.mxu0 0.0
        %493 = vmatprep.subr.mxu0 0.0
        %494 = vmatpush1.msra.mxu0 0.0
        %495 = vmatprep.subr.mxu0 0.0
        %496 = vmatpush1.msra.mxu0 0.0
        %497 = vmatprep.subr.mxu0 0.0
        %498 = vmatpush1.msra.mxu0 0.0
        %499 = vmatprep.subr.mxu0 0.0
        %500 = vmatpush1.msra.mxu0 0.0
        %501 = vmatprep.subr.mxu0 0.0
        %502 = vmatpush1.msra.mxu0 0.0
        %503 = vmatprep.subr.mxu0 0.0
        %504 = vmatpush1.msra.mxu0 0.0
        %505 = vmatprep.subr.mxu0 0.0
        %506 = vmatpush1.msra.mxu0 0.0
        %507 = vmatprep.subr.mxu0 0.0
        %508 = vmatpush1.msra.mxu0 0.0
        %509 = vmatprep.subr.mxu0 0.0
        %510 = vmatpush1.msra.mxu0 0.0
        %511 = vmatprep.subr.mxu0 0.0
        %512 = vmatpush1.msra.mxu0 0.0
        %513 = vmatprep.subr.mxu0 0.0
        %514 = vmatpush1.msra.mxu0 0.0
        %515 = vmatprep.subr.mxu0 0.0
        %516 = vmatpush1.msra.mxu0 0.0
        %517 = vmatprep.subr.mxu0 0.0
        %518 = vmatpush1.msra.mxu0 0.0
        %519 = vmatprep.subr.mxu0 0.0
        %520 = vmatpush1.msra.mxu0 0.0
        %521 = vmatprep.mubr.f32.mxu0 0.0
        %522 = vmatmul.mubr.f32.gmra.mrb[0].mxu0 %v455
        %v523 = vpop.f32.mrb[0].mxu0
        %v524 = vadd.f32 0.0, %v523
        %v525 = vpop.f32.mrb[0].mxu0
        %526 = vdwg.mxu0
        %v528 = vcombine.high %v524, %v524
        %v530 = vunpack.c.l.s4 1966171168
        %v531 = vunpack.c.0.s8 %v530
        %v532 = vlaneseq
        %v533 = vshrl.u32 %v532, 7
        %v534 = vsub.s32 %v531, %v533
        %v535 = vrot.slane %v524, %v534
        %v537 = vunpack.c.l.s4 1966171168
        %v538 = vunpack.c.0.s8 %v537
        %v539 = vlaneseq
        %v540 = vshrl.u32 %v539, 7
        %v541 = vsub.s32 %v538, %v540
        %v542 = vrot.slane %v528, %v541
        %v543 = vcombine.high %v535, %v535
        %v544 = vcombine.high %v542, %v542
        %v546 = vunpack.c.l.s4 1966171168
        %v547 = vunpack.c.0.s8 %v546
        %v548 = vlaneseq
        %v549 = vshrl.u32 %v548, 7
        %v550 = vsub.s32 %v547, %v549
        %v551 = vrot.slane %v535, %v550
        %v553 = vunpack.c.l.s4 1966171168
        %v554 = vunpack.c.0.s8 %v553
        %v555 = vlaneseq
        %v556 = vshrl.u32 %v555, 7
        %v557 = vsub.s32 %v554, %v556
        %v558 = vrot.slane %v542, %v557
        %v560 = vunpack.c.l.s4 1966171168
        %v561 = vunpack.c.0.s8 %v560
        %v562 = vlaneseq
        %v563 = vshrl.u32 %v562, 7
        %v564 = vsub.s32 %v561, %v563
        %v565 = vrot.slane %v543, %v564
        %v567 = vunpack.c.l.s4 1966171168
        %v568 = vunpack.c.0.s8 %v567
        %v569 = vlaneseq
        %v570 = vshrl.u32 %v569, 7
        %v571 = vsub.s32 %v568, %v570
        %v572 = vrot.slane %v544, %v571
        %v573 = vcombine.high %v551, %v551
        %v574 = vcombine.high %v558, %v558
        %v575 = vcombine.high %v565, %v565
        %v576 = vcombine.high %v572, %v572
        %v577 = vlaneseq
        %v578 = vshrl.u32 %v577, 7
        %v579 = vsub.s32 0, %v578
        %v580 = vrot.slane %v551, %v579
        %v581 = vlaneseq
        %v582 = vshrl.u32 %v581, 7
        %v583 = vsub.s32 0, %v582
        %v584 = vrot.slane %v565, %v583
        %v585 = vlaneseq
        %v586 = vshrl.u32 %v585, 7
        %v587 = vsub.s32 0, %v586
        %v588 = vrot.slane %v573, %v587
        %v589 = vlaneseq
        %v590 = vshrl.u32 %v589, 7
        %v591 = vsub.s32 0, %v590
        %v592 = vrot.slane %v575, %v591
        %v593 = vlaneseq
        %v594 = vshrl.u32 %v593, 7
        %v595 = vsub.s32 0, %v594
        %v596 = vrot.slane %v558, %v595
        %v597 = vlaneseq
        %v598 = vshrl.u32 %v597, 7
        %v599 = vsub.s32 0, %v598
        %v600 = vrot.slane %v572, %v599
        %v601 = vlaneseq
        %v602 = vshrl.u32 %v601, 7
        %v603 = vsub.s32 0, %v602
        %v604 = vrot.slane %v574, %v603
        %v605 = vlaneseq
        %v606 = vshrl.u32 %v605, 7
        %v607 = vsub.s32 0, %v606
        %v608 = vrot.slane %v576, %v607
        %v617 = vmul.f32 %v312, %v580
        %v618 = vmul.f32 %v317, %v584
        %v619 = vmul.f32 %v322, %v588
        %v620 = vmul.f32 %v327, %v592
        %v621 = vmul.f32 %v332, %v596
        %v622 = vmul.f32 %v337, %v600
        %v623 = vmul.f32 %v342, %v604
        %v624 = vmul.f32 %v347, %v608
        %v625 = vsel %vm364, %v617, 0.0
        %626 = vadd.xlane.f32.xlu0 %v625
        %v627 = vpop.xlane.xlu0 %626
        %v628 = vsel %vm364, %v618, 0.0
        %629 = vadd.xlane.f32.xlu0 %v628
        %v630 = vpop.xlane.xlu0 %629
        %v631 = vsel %vm364, %v619, 0.0
        %632 = vadd.xlane.f32.xlu0 %v631
        %v633 = vpop.xlane.xlu0 %632
        %v634 = vsel %vm364, %v620, 0.0
        %635 = vadd.xlane.f32.xlu0 %v634
        %v636 = vpop.xlane.xlu0 %635
        %v637 = vsel %vm364, %v621, 0.0
        %638 = vadd.xlane.f32.xlu0 %v637
        %v639 = vpop.xlane.xlu0 %638
        %v640 = vsel %vm364, %v622, 0.0
        %641 = vadd.xlane.f32.xlu0 %v640
        %v642 = vpop.xlane.xlu0 %641
        %v643 = vsel %vm364, %v623, 0.0
        %644 = vadd.xlane.f32.xlu0 %v643
        %v645 = vpop.xlane.xlu0 %644
        %v646 = vsel %vm364, %v624, 0.0
        %647 = vadd.xlane.f32.xlu0 %v646
        %v648 = vpop.xlane.xlu0 %647
        %v657 = vlaneseq
        %v658 = vshrl.u32 %v657, 7
        %v659 = vsub.s32 %v196, %v658
        %v660 = vrot.slane %v627, %v659
        %v661 = vlaneseq
        %v662 = vshrl.u32 %v661, 7
        %v663 = vsub.s32 %v196, %v662
        %v664 = vrot.slane %v630, %v663
        %v665 = vlaneseq
        %v666 = vshrl.u32 %v665, 7
        %v667 = vsub.s32 %v196, %v666
        %v668 = vrot.slane %v633, %v667
        %v669 = vlaneseq
        %v670 = vshrl.u32 %v669, 7
        %v671 = vsub.s32 %v196, %v670
        %v672 = vrot.slane %v636, %v671
        %v673 = vlaneseq
        %v674 = vshrl.u32 %v673, 7
        %v675 = vsub.s32 %v196, %v674
        %v676 = vrot.slane %v639, %v675
        %v677 = vlaneseq
        %v678 = vshrl.u32 %v677, 7
        %v679 = vsub.s32 %v196, %v678
        %v680 = vrot.slane %v642, %v679
        %v681 = vlaneseq
        %v682 = vshrl.u32 %v681, 7
        %v683 = vsub.s32 %v196, %v682
        %v684 = vrot.slane %v645, %v683
        %v685 = vlaneseq
        %v686 = vshrl.u32 %v685, 7
        %v687 = vsub.s32 %v196, %v686
        %v688 = vrot.slane %v648, %v687
        %v689 = vsel %vm441, %v664, %v660
        %v690 = vsel %vm443, %v668, %v689
        %v691 = vsel %vm445, %v672, %v690
        %v692 = vsel %vm447, %v676, %v691
        %v693 = vsel %vm449, %v680, %v692
        %v694 = vsel %vm451, %v684, %v693
        %v695 = vsel %vm453, %v688, %v694
        %v697 = vsel %vm350, %v695, -inf
        %vm698 = vcmask 64512
        %v699 = vsel %vm698, %v697, -inf
        %700 = vmax.xlane.f32.xlu0 %v699
        %v701 = vpop.xlane.xlu0 %700
        %v703 = vlaneseq
        %v704 = vshrl.u32 %v703, 7
        %v705 = vsub.s32 0, %v704
        %v706 = vrot.slane %v701, %v705
        %v707 = vlaneseq
        %v708 = vshrl.u32 %v707, 7
        %v709 = vsub.s32 1, %v708
        %v710 = vrot.slane %v701, %v709
        %v711 = vlaneseq
        %v712 = vshrl.u32 %v711, 7
        %v713 = vsub.s32 2, %v712
        %v714 = vrot.slane %v701, %v713
        %v715 = vlaneseq
        %v716 = vshrl.u32 %v715, 7
        %v717 = vsub.s32 3, %v716
        %v718 = vrot.slane %v701, %v717
        %v719 = vlaneseq
        %v720 = vshrl.u32 %v719, 7
        %v721 = vsub.s32 4, %v720
        %v722 = vrot.slane %v701, %v721
        %v723 = vlaneseq
        %v724 = vshrl.u32 %v723, 7
        %v725 = vsub.s32 5, %v724
        %v726 = vrot.slane %v701, %v725
        %v727 = vlaneseq
        %v728 = vshrl.u32 %v727, 7
        %v729 = vsub.s32 6, %v728
        %v730 = vrot.slane %v701, %v729
        %v731 = vlaneseq
        %v732 = vshrl.u32 %v731, 7
        %v733 = vsub.s32 7, %v732
        %v734 = vrot.slane %v701, %v733
        %v743 = vsub.f32 %v627, %v706
        %v744 = vsub.f32 %v630, %v710
        %v745 = vsub.f32 %v633, %v714
        %v746 = vsub.f32 %v636, %v718
        %v747 = vsub.f32 %v639, %v722
        %v748 = vsub.f32 %v642, %v726
        %v749 = vsub.f32 %v645, %v730
        %v750 = vsub.f32 %v648, %v734
        %v751 = vmul.f32 %v743, 1.442695
        %v752 = vpow.pop %v751
        %v753 = vmul.f32 %v744, 1.442695
        %v754 = vpow.pop %v753
        %v755 = vmul.f32 %v745, 1.442695
        %v756 = vpow.pop %v755
        %v757 = vmul.f32 %v746, 1.442695
        %v758 = vpow.pop %v757
        %v759 = vmul.f32 %v747, 1.442695
        %v760 = vpow.pop %v759
        %v761 = vmul.f32 %v748, 1.442695
        %v762 = vpow.pop %v761
        %v763 = vmul.f32 %v749, 1.442695
        %v764 = vpow.pop %v763
        %v765 = vmul.f32 %v750, 1.442695
        %v766 = vpow.pop %v765
        %769 = vbcast.lane.b32.xlu0 %v352, 256
        %v770 = vpop.permute.xlu0 %769
        %v772 = vmul.f32 %v752, %v770
        %v773 = vmul.f32 %v754, %v770
        %v774 = vmul.f32 %v756, %v770
        %v775 = vmul.f32 %v758, %v770
        %v776 = vmul.f32 %v760, %v770
        %v777 = vmul.f32 %v762, %v770
        %v778 = vmul.f32 %v764, %v770
        %v779 = vmul.f32 %v766, %v770
        %788 = vset.pattern.permute.xlu0 0
        %789 = vperm.xlu0 %788, %v772
        %v790 = vpop.permute.xlu0 %789
        %791 = vset.pattern.permute.xlu0 0
        %792 = vperm.xlu0 %791, %v773
        %v793 = vpop.permute.xlu0 %792
        %794 = vset.pattern.permute.xlu0 0
        %795 = vperm.xlu0 %794, %v774
        %v796 = vpop.permute.xlu0 %795
        %797 = vset.pattern.permute.xlu0 0
        %798 = vperm.xlu0 %797, %v775
        %v799 = vpop.permute.xlu0 %798
        %800 = vset.pattern.permute.xlu0 0
        %801 = vperm.xlu0 %800, %v776
        %v802 = vpop.permute.xlu0 %801
        %803 = vset.pattern.permute.xlu0 0
        %804 = vperm.xlu0 %803, %v777
        %v805 = vpop.permute.xlu0 %804
        %806 = vset.pattern.permute.xlu0 0
        %807 = vperm.xlu0 %806, %v778
        %v808 = vpop.permute.xlu0 %807
        %809 = vset.pattern.permute.xlu0 0
        %810 = vperm.xlu0 %809, %v779
        %v811 = vpop.permute.xlu0 %810
        %v812 = vlaneseq
        %v813 = vshrl.u32 %v812, 7
        %v814 = vsub.s32 %v196, %v813
        %v815 = vrot.slane %v790, %v814
        %v816 = vlaneseq
        %v817 = vshrl.u32 %v816, 7
        %v818 = vsub.s32 %v196, %v817
        %v819 = vrot.slane %v793, %v818
        %v820 = vlaneseq
        %v821 = vshrl.u32 %v820, 7
        %v822 = vsub.s32 %v196, %v821
        %v823 = vrot.slane %v796, %v822
        %v824 = vlaneseq
        %v825 = vshrl.u32 %v824, 7
        %v826 = vsub.s32 %v196, %v825
        %v827 = vrot.slane %v799, %v826
        %v828 = vlaneseq
        %v829 = vshrl.u32 %v828, 7
        %v830 = vsub.s32 %v196, %v829
        %v831 = vrot.slane %v802, %v830
        %v832 = vlaneseq
        %v833 = vshrl.u32 %v832, 7
        %v834 = vsub.s32 %v196, %v833
        %v835 = vrot.slane %v805, %v834
        %v836 = vlaneseq
        %v837 = vshrl.u32 %v836, 7
        %v838 = vsub.s32 %v196, %v837
        %v839 = vrot.slane %v808, %v838
        %v840 = vlaneseq
        %v841 = vshrl.u32 %v840, 7
        %v842 = vsub.s32 %v196, %v841
        %v843 = vrot.slane %v811, %v842
        %v844 = vsel %vm441, %v819, %v815
        %v845 = vsel %vm443, %v823, %v844
        %v846 = vsel %vm445, %v827, %v845
        %v847 = vsel %vm447, %v831, %v846
        %v848 = vsel %vm449, %v835, %v847
        %v849 = vsel %vm451, %v839, %v848
        %v850 = vsel %vm453, %v843, %v849
        %v852 = vsel %vm698, %v850, 0.0
        %853 = vadd.xlane.f32.xlu0 %v852
        %v854 = vpop.xlane.xlu0 %853
        %v856 = vlaneseq
        %v857 = vshrl.u32 %v856, 7
        %v858 = vsub.s32 0, %v857
        %v859 = vrot.slane %v854, %v858
        %v860 = vlaneseq
        %v861 = vshrl.u32 %v860, 7
        %v862 = vsub.s32 1, %v861
        %v863 = vrot.slane %v854, %v862
        %v864 = vlaneseq
        %v865 = vshrl.u32 %v864, 7
        %v866 = vsub.s32 2, %v865
        %v867 = vrot.slane %v854, %v866
        %v868 = vlaneseq
        %v869 = vshrl.u32 %v868, 7
        %v870 = vsub.s32 3, %v869
        %v871 = vrot.slane %v854, %v870
        %v872 = vlaneseq
        %v873 = vshrl.u32 %v872, 7
        %v874 = vsub.s32 4, %v873
        %v875 = vrot.slane %v854, %v874
        %v876 = vlaneseq
        %v877 = vshrl.u32 %v876, 7
        %v878 = vsub.s32 5, %v877
        %v879 = vrot.slane %v854, %v878
        %v880 = vlaneseq
        %v881 = vshrl.u32 %v880, 7
        %v882 = vsub.s32 6, %v881
        %v883 = vrot.slane %v854, %v882
        %v884 = vlaneseq
        %v885 = vshrl.u32 %v884, 7
        %v886 = vsub.s32 7, %v885
        %v887 = vrot.slane %v854, %v886
        %v896 = vrcp.pop %v859
        %v897 = vmul.f32 %v772, %v896
        %v898 = vrcp.pop %v863
        %v899 = vmul.f32 %v773, %v898
        %v900 = vrcp.pop %v867
        %v901 = vmul.f32 %v774, %v900
        %v902 = vrcp.pop %v871
        %v903 = vmul.f32 %v775, %v902
        %v904 = vrcp.pop %v875
        %v905 = vmul.f32 %v776, %v904
        %v906 = vrcp.pop %v879
        %v907 = vmul.f32 %v777, %v906
        %v908 = vrcp.pop %v883
        %v909 = vmul.f32 %v778, %v908
        %v910 = vrcp.pop %v887
        %v911 = vmul.f32 %v779, %v910
        %913 = vset.pattern.permute.xlu0 0
        %914 = vperm.xlu0 %913, %v897
        %v915 = vpop.permute.xlu0 %914
        %918 = vset.pattern.permute.xlu0 0
        %919 = vperm.xlu0 %918, %v899
        %v920 = vpop.permute.xlu0 %919
        %923 = vset.pattern.permute.xlu0 0
        %924 = vperm.xlu0 %923, %v901
        %v925 = vpop.permute.xlu0 %924
        %928 = vset.pattern.permute.xlu0 0
        %929 = vperm.xlu0 %928, %v903
        %v930 = vpop.permute.xlu0 %929
        %933 = vset.pattern.permute.xlu0 0
        %934 = vperm.xlu0 %933, %v905
        %v935 = vpop.permute.xlu0 %934
        %938 = vset.pattern.permute.xlu0 0
        %939 = vperm.xlu0 %938, %v907
        %v940 = vpop.permute.xlu0 %939
        %943 = vset.pattern.permute.xlu0 0
        %944 = vperm.xlu0 %943, %v909
        %v945 = vpop.permute.xlu0 %944
        %948 = vset.pattern.permute.xlu0 0
        %949 = vperm.xlu0 %948, %v911
        %v950 = vpop.permute.xlu0 %949
        %v952 = vmul.f32 %v915, %v312
        %v953 = vmul.f32 %v920, %v317
        %v954 = vmul.f32 %v925, %v322
        %v955 = vmul.f32 %v930, %v327
        %v956 = vmul.f32 %v935, %v332
        %v957 = vmul.f32 %v940, %v337
        %v958 = vmul.f32 %v945, %v342
        %v959 = vmul.f32 %v950, %v347
        %v960 = vsel %vm364, %v952, 0.0
        %v961 = vrot.slane %v960, 4
        %v962 = vadd.f32 %v960, %v961
        %v963 = vrot.slane %v962, 2
        %v964 = vadd.f32 %v962, %v963
        %v965 = vrot.slane %v964, 1
        %v966 = vadd.f32 %v964, %v965
        %v967 = vsel %vm364, %v953, 0.0
        %v968 = vrot.slane %v967, 4
        %v969 = vadd.f32 %v967, %v968
        %v970 = vrot.slane %v969, 2
        %v971 = vadd.f32 %v969, %v970
        %v972 = vrot.slane %v971, 1
        %v973 = vadd.f32 %v971, %v972
        %v974 = vsel %vm364, %v954, 0.0
        %v975 = vrot.slane %v974, 4
        %v976 = vadd.f32 %v974, %v975
        %v977 = vrot.slane %v976, 2
        %v978 = vadd.f32 %v976, %v977
        %v979 = vrot.slane %v978, 1
        %v980 = vadd.f32 %v978, %v979
        %v981 = vsel %vm364, %v955, 0.0
        %v982 = vrot.slane %v981, 4
        %v983 = vadd.f32 %v981, %v982
        %v984 = vrot.slane %v983, 2
        %v985 = vadd.f32 %v983, %v984
        %v986 = vrot.slane %v985, 1
        %v987 = vadd.f32 %v985, %v986
        %v988 = vsel %vm364, %v956, 0.0
        %v989 = vrot.slane %v988, 4
        %v990 = vadd.f32 %v988, %v989
        %v991 = vrot.slane %v990, 2
        %v992 = vadd.f32 %v990, %v991
        %v993 = vrot.slane %v992, 1
        %v994 = vadd.f32 %v992, %v993
        %v995 = vsel %vm364, %v957, 0.0
        %v996 = vrot.slane %v995, 4
        %v997 = vadd.f32 %v995, %v996
        %v998 = vrot.slane %v997, 2
        %v999 = vadd.f32 %v997, %v998
        %v1000 = vrot.slane %v999, 1
        %v1001 = vadd.f32 %v999, %v1000
        %v1002 = vsel %vm364, %v958, 0.0
        %v1003 = vrot.slane %v1002, 4
        %v1004 = vadd.f32 %v1002, %v1003
        %v1005 = vrot.slane %v1004, 2
        %v1006 = vadd.f32 %v1004, %v1005
        %v1007 = vrot.slane %v1006, 1
        %v1008 = vadd.f32 %v1006, %v1007
        %v1009 = vsel %vm364, %v959, 0.0
        %v1010 = vrot.slane %v1009, 4
        %v1011 = vadd.f32 %v1009, %v1010
        %v1012 = vrot.slane %v1011, 2
        %v1013 = vadd.f32 %v1011, %v1012
        %v1014 = vrot.slane %v1013, 1
        %v1015 = vadd.f32 %v1013, %v1014
        %v1024 = vsel %vm441, %v973, %v966
        %v1025 = vsel %vm443, %v980, %v1024
        %v1026 = vsel %vm445, %v987, %v1025
        %v1027 = vsel %vm447, %v994, %v1026
        %v1028 = vsel %vm449, %v1001, %v1027
        %v1029 = vsel %vm451, %v1008, %v1028
        %v1030 = vsel %vm453, %v1015, %v1029
        %1032 = vst.msk [vmem:[%s164] sm:$0xff] %vm364, %v1030
        %s1033 = sand.u32 %s93, 1
        %s1034 = scalar_lea.sflag [#allocation3], %s1033
        %s1035 = sand.u32 %s93, 1
        %s1036 = smul.addr %s1035, 8
        %s1037 = scalar_lea.vmem [#allocation2], %s1036
        // Predicated region
        $region33: #{tpu_custom_call.1} parent=31 // pred_check
          %p1038 = pneg %p103
        $region34: #{tpu_custom_call.1} parent=31 // pred_check_branch
          %1040 = sbr.rel (%p1038) target = $region36
        $region35: #{tpu_custom_call.1} parent=31 // pred_region
          %s1042 = ssub.s32 128, 128
          %1043 = vsyncadd %s1034, %s1042
          %s1044 = smul.addr %s17, 128
          %s1045 = scalar_lea.hbm %s3, %s1044
          %s1047 = sshll.u32 %s1037, 4
          %s1048 = int_to_ptr.vmem [resolvable:$true] %s1047
          %1050 = dma.vmem_to_hbm [thread:$0]  %s1048, 128, %s1045, %s1034
        $region36: #{tpu_custom_call.1} parent=31 // pred_fallthru
          _
      $region32: #{tpu_custom_call.1} parent=5 // pred_fallthru
        _
      %p1051 = scmp.le.s32.totalorder 2, %s12
      // Predicated region
      $region37: #{tpu_custom_call.1} parent=5 // pred_check
        %p1052 = pneg %p1051
      $region38: #{tpu_custom_call.1} parent=5 // pred_check_branch
        %1054 = sbr.rel (%p1052) target = $region40
      $region39: #{tpu_custom_call.1} parent=5 // pred_region
        %s1055 = ssub.s32 %s12, 2
        // Predicated region
        $region41: #{tpu_custom_call.1} parent=39 // pred_check
          %p1056 = pneg %p109
        $region42: #{tpu_custom_call.1} parent=39 // pred_check_branch
          %1058 = sbr.rel (%p1056) target = $region44
        $region43: #{tpu_custom_call.1} parent=39 // pred_region
          %s1059 = sand.u32 %s94, 1
          %s1060 = scalar_lea.sflag [#allocation3], %s1059
          %s1061 = sand.u32 %s94, 1
          %s1062 = smul.addr %s1061, 8
          %s1063 = scalar_lea.vmem [#allocation2], %s1062
          %1064 = dma.done %s1060, 128
        $region44: #{tpu_custom_call.1} parent=39 // pred_fallthru
          _
      $region40: #{tpu_custom_call.1} parent=5 // pred_fallthru
        _
    $region6: #{tpu_custom_call.1} parent=1 // loop_footer
      %s16 = sadd.s32 1, %s12
    $region7: #{tpu_custom_call.1} parent=1 // loop_footer_branch
      %11 = sbr.rel target = $region3
    $region8: #{tpu_custom_call.1} parent=1 // loop_exit
      _
    %1065 = vsyncpa [#allocation3], 1
    %s1066 = scalar_lea.sflag [#allocation3], 1
    %1067 = vsyncpa %s1066, 1

</llo_original>
